<compile_context>
chip_gen: v7x
topology: tpu7x:2x2x1
jax: 0.10.0
libtpu: 0.0.40
codegen_flags: <defaults>
</compile_context>

<pallas_src>
import math
import functools

import jax
import jax.numpy as jnp
from jax.experimental import pallas as pl
from jax.experimental.pallas import tpu as pltpu


def _layernorm_kernel(x_ref, gamma_ref, beta_ref, o_ref, *, eps, inv_d):
    x = x_ref[...].astype(jnp.float32)                     # (tm, D)
    # Fused single-pass statistics over the last (lane) axis.
    s = jnp.sum(x, axis=-1, keepdims=True)                 # (tm, 1)
    ss = jnp.sum(x * x, axis=-1, keepdims=True)            # (tm, 1)
    mean = s * inv_d
    var = ss * inv_d - mean * mean                         # biased (unbiased=False)
    var = jnp.maximum(var, 0.0)                            # guard tiny cancellation
    inv = jax.lax.rsqrt(var + eps)                         # EUP, ~free slot
    y = (x - mean) * inv
    # gamma/beta are f32, shape (1, D): broadcast over rows.
    o_ref[...] = (gamma_ref[...] * y + beta_ref[...]).astype(o_ref.dtype)


def layer_norm(x, gamma, beta, eps=1e-12,
               max_block_rows=1024,
               vmem_budget_bytes=40 * 1024 * 1024):
    """x: (..., d_model); gamma/beta: (d_model,). Returns same shape/dtype as x."""
    orig_shape = x.shape
    d_model = orig_shape[-1]
    rows = math.prod(orig_shape[:-1]) if len(orig_shape) > 1 else 1
    x2 = x.reshape(rows, d_model)                          # contiguous reshape: free

    # Pre-cast scale/shift once; kept resident in VMEM across the grid.
    gamma2 = gamma.astype(jnp.float32).reshape(1, d_model)
    beta2 = beta.astype(jnp.float32).reshape(1, d_model)

    # --- Row tile: biggest multiple of 8 that fits the VMEM budget
    # (2 double-buffered input buffers + 2 output buffers + f32 temporaries).
    itemsize = jnp.dtype(x.dtype).itemsize
    bytes_per_row = 4 * d_model * itemsize + 8 * d_model   # conservative estimate
    tm = (vmem_budget_bytes // bytes_per_row) // 8 * 8
    tm = int(max(8, min(max_block_rows, tm)))
    tm = min(tm, ((rows + 7) // 8) * 8)                    # never bigger than needed

    # Ragged last block handled by Pallas (partial reads/writes clipped);
    # each row is normalized independently so pad-row garbage never matters.
    grid = (pl.cdiv(rows, tm),)

    kernel = functools.partial(_layernorm_kernel,
                               eps=float(eps), inv_d=1.0 / float(d_model))

    out = pl.pallas_call(
        kernel,
        out_shape=jax.ShapeDtypeStruct((rows, d_model), x.dtype),
        grid_spec=pltpu.PrefetchScalarGridSpec(
            num_scalar_prefetch=0,
            grid=grid,
            in_specs=[
                pl.BlockSpec((tm, d_model), lambda i: (i, 0)),
                pl.BlockSpec((1, d_model), lambda i: (0, 0)),   # resident gamma
                pl.BlockSpec((1, d_model), lambda i: (0, 0)),   # resident beta
            ],
            out_specs=pl.BlockSpec((tm, d_model), lambda i: (i, 0)),
        ),
        compiler_params=pltpu.CompilerParams(
            dimension_semantics=("parallel",),
            vmem_limit_bytes=64 * 1024 * 1024,
        ),
    )(x2, gamma2, beta2)

    return out.reshape(orig_shape)


if __name__ == "__main__":
    key = jax.random.PRNGKey(0)
    batch, seq, d_model = 2, 8, 32

    x = jax.random.normal(key, (batch, seq, d_model), dtype=jnp.float32)

    # Deterministic parameters, matching nn.Parameter(torch.ones/zeros(d_model))
    gamma = jnp.ones((d_model,), dtype=jnp.float32)
    beta = jnp.zeros((d_model,), dtype=jnp.float32)
    eps = 1e-12

    out = layer_norm(x, gamma, beta, eps=eps)
    out = jax.block_until_ready(out)

    # Pure-JAX reference (biased variance, matching torch var(unbiased=False))
    mean = x.mean(-1, keepdims=True)
    var = ((x - mean) ** 2).mean(-1, keepdims=True)
    ref = gamma * ((x - mean) / jnp.sqrt(var + eps)) + beta
    assert out.shape == x.shape and out.dtype == x.dtype
    assert jnp.allclose(out, ref, atol=1e-4, rtol=1e-4), "mismatch vs reference"

    print("KERNEL_OK")
</pallas_src>

<mosaic_0001>
module attributes {stable_mosaic.version = 11 : i64} {
  func.func @_layernorm_kernel(%arg0: i32, %arg1: memref<16x32xf32, #tpu.memory_space<vmem>>, %arg2: memref<1x32xf32, #tpu.memory_space<vmem>>, %arg3: memref<1x32xf32, #tpu.memory_space<vmem>>, %arg4: memref<16x32xf32, #tpu.memory_space<vmem>>) attributes {dimension_semantics = [#tpu.dimension_semantics<parallel>], iteration_bounds = array<i64: 1>, scalar_prefetch = 0 : i64, scratch_operands = 0 : i64, tpu.core_type = #tpu.core_type<tc>, window_params = [{transform_indices = @transform_0, window_bounds = array<i64: 16, 32>}, {pipeline_mode = #tpu.pipeline_mode<synchronous>, transform_indices = @transform_1, window_bounds = array<i64: 1, 32>}, {pipeline_mode = #tpu.pipeline_mode<synchronous>, transform_indices = @transform_2, window_bounds = array<i64: 1, 32>}, {transform_indices = @transform_3, window_bounds = array<i64: 16, 32>}]} {
    %c0 = arith.constant 0 : index
    %c0_0 = arith.constant 0 : index
    %0 = vector.load %arg1[%c0, %c0_0] : memref<16x32xf32, #tpu.memory_space<vmem>>, vector<16x32xf32>
    %cst = arith.constant dense<0.000000e+00> : vector<16xf32>
    %1 = vector.multi_reduction <add>, %0, %cst [1] : vector<16x32xf32> to vector<16xf32>
    %2 = vector.shape_cast %1 : vector<16xf32> to vector<16x1xf32>
    %3 = arith.mulf %0, %0 : vector<16x32xf32>
    %cst_1 = arith.constant dense<0.000000e+00> : vector<16xf32>
    %4 = vector.multi_reduction <add>, %3, %cst_1 [1] : vector<16x32xf32> to vector<16xf32>
    %5 = vector.shape_cast %4 : vector<16xf32> to vector<16x1xf32>
    %cst_2 = arith.constant 3.125000e-02 : f32
    %6 = vector.broadcast %cst_2 : f32 to vector<16x1xf32>
    %7 = arith.mulf %2, %6 : vector<16x1xf32>
    %cst_3 = arith.constant 3.125000e-02 : f32
    %8 = vector.broadcast %cst_3 : f32 to vector<16x1xf32>
    %9 = arith.mulf %5, %8 : vector<16x1xf32>
    %10 = arith.mulf %7, %7 : vector<16x1xf32>
    %11 = arith.subf %9, %10 : vector<16x1xf32>
    %cst_4 = arith.constant 0.000000e+00 : f32
    %12 = vector.broadcast %cst_4 : f32 to vector<16x1xf32>
    %13 = arith.maximumf %11, %12 : vector<16x1xf32>
    %cst_5 = arith.constant 9.99999996E-13 : f32
    %14 = vector.broadcast %cst_5 : f32 to vector<16x1xf32>
    %15 = arith.addf %13, %14 : vector<16x1xf32>
    %16 = math.rsqrt %15 : vector<16x1xf32>
    %17 = vector.broadcast %7 : vector<16x1xf32> to vector<16x32xf32>
    %18 = arith.subf %0, %17 : vector<16x32xf32>
    %19 = vector.broadcast %16 : vector<16x1xf32> to vector<16x32xf32>
    %20 = arith.mulf %18, %19 : vector<16x32xf32>
    %c0_6 = arith.constant 0 : index
    %c0_7 = arith.constant 0 : index
    %21 = vector.load %arg2[%c0_6, %c0_7] : memref<1x32xf32, #tpu.memory_space<vmem>>, vector<1x32xf32>
    %22 = vector.broadcast %21 : vector<1x32xf32> to vector<16x32xf32>
    %23 = arith.mulf %22, %20 : vector<16x32xf32>
    %c0_8 = arith.constant 0 : index
    %c0_9 = arith.constant 0 : index
    %24 = vector.load %arg3[%c0_8, %c0_9] : memref<1x32xf32, #tpu.memory_space<vmem>>, vector<1x32xf32>
    %25 = vector.broadcast %24 : vector<1x32xf32> to vector<16x32xf32>
    %26 = arith.addf %23, %25 : vector<16x32xf32>
    %c0_10 = arith.constant 0 : index
    %c0_11 = arith.constant 0 : index
    %27 = vector.load %arg4[%c0_10, %c0_11] : memref<16x32xf32, #tpu.memory_space<vmem>>, vector<16x32xf32>
    tpu.vector_store %arg4[%c0_10, %c0_11], %26 {strides = array<i32>} : memref<16x32xf32, #tpu.memory_space<vmem>>, vector<16x32xf32>,
    return
  }
  func.func @transform_0(%arg0: i32) -> (i32, i32) {
    %c0_i32 = arith.constant 0 : i32
    %c0_i32_0 = arith.constant 0 : i32
    return %arg0, %c0_i32 : i32, i32
  }
  func.func @transform_1(%arg0: i32) -> (i32, i32) {
    %c0_i32 = arith.constant 0 : i32
    %c0_i32_0 = arith.constant 0 : i32
    %c0_i32_1 = arith.constant 0 : i32
    return %c0_i32, %c0_i32_0 : i32, i32
  }
  func.func @transform_2(%arg0: i32) -> (i32, i32) {
    %c0_i32 = arith.constant 0 : i32
    %c0_i32_0 = arith.constant 0 : i32
    %c0_i32_1 = arith.constant 0 : i32
    return %c0_i32, %c0_i32_0 : i32, i32
  }
  func.func @transform_3(%arg0: i32) -> (i32, i32) {
    %c0_i32 = arith.constant 0 : i32
    %c0_i32_0 = arith.constant 0 : i32
    return %arg0, %c0_i32 : i32, i32
  }
}

</mosaic_0001>

<llo_original>
// kernel: tpu_custom_call.1
$region0: #{tpu_custom_call.1}
  #allocation0 [shape = 'u32[]', space=smem, size = 0x4, offset = 0x4, fixed_abs, tag = 'smem constant byte address 0x4 - core index']
  #allocation1 [shape = 'u32[144,128]{1,0:T(1,128)}', space=vmem, size = 0x12000, scoped, tag = 'internal scratch']
  %s0 = inlined_call_operand.hbm [shape: f32[16,32], index: 0, kind: input, shape index: {}]
  %s1 = inlined_call_operand.hbm [shape: f32[1,32], index: 1, kind: input, shape index: {}]
  %s2 = inlined_call_operand.hbm [shape: f32[1,32], index: 2, kind: input, shape index: {}]
  %s3 = inlined_call_operand.hbm [shape: f32[16,32], index: 3, kind: output, shape index: {}]
  %s4 = sld [smem:[#allocation0]]
  $region34: #{tpu_custom_call.1} parent=0
    _
  %s6 = ssub.s32 1, %s4
  %s7 = scalar_select 0, %s6, %s4
  $region1: #{tpu_custom_call.1} parent=0
    #allocation2 [shape = 'u8[8192]{0}', space=vmem, size = 0x2000, scoped, tag = 'input window, operand 0, single buffered']
    #allocation3 [shape = 's32[1]{0}', space=sflag, size = 0x4, scoped, tag = 'scoped memory for tpu_custom_call.1']
    #allocation4 [shape = 's32[1]{0}', space=sflag, size = 0x4, scoped, tag = 'scoped memory for tpu_custom_call.1']
    #allocation5 [shape = 'u8[512]{0}', space=vmem, size = 0x400, scoped, tag = 'input window, operand 1, single buffered']
    #allocation6 [shape = 's32[1]{0}', space=sflag, size = 0x4, scoped, tag = 'scoped memory for tpu_custom_call.1']
    #allocation7 [shape = 'u8[512]{0}', space=vmem, size = 0x400, scoped, tag = 'input window, operand 2, single buffered']
    #allocation8 [shape = 'u8[8192]{0}', space=vmem, size = 0x2000, scoped, tag = 'output window, operand 0, single buffered']
    %8 = vsyncpa [#allocation3], 0
    %9 = vsyncpa [#allocation6], 0
    %10 = vsyncpa [#allocation4], 0
    // Predicated region
    $region2: #{tpu_custom_call.1} parent=1 // pred_check
      _
    $region3: #{tpu_custom_call.1} parent=1 // pred_check_branch
      %12 = sbr.rel (0) target = $region5
    $region4: #{tpu_custom_call.1} parent=1 // pred_region
      %s14 = ssub.s32 256, 256
      %15 = vsyncadd [#allocation3], %s14
      %s16 = sshll.u32 [#allocation2], 4
      %s17 = int_to_ptr.vmem [resolvable:$true] %s16
      %22 = dma.hbm_to_vmem [thread:$0]  %s0, 256, %s17, [#allocation3], 128, 128, 8
    $region5: #{tpu_custom_call.1} parent=1 // pred_fallthru
      _
    // Predicated region
    $region6: #{tpu_custom_call.1} parent=1 // pred_check
      _
    $region7: #{tpu_custom_call.1} parent=1 // pred_check_branch
      %24 = sbr.rel (0) target = $region9
    $region8: #{tpu_custom_call.1} parent=1 // pred_region
      %s26 = ssub.s32 16, 16
      %27 = vsyncadd [#allocation6], %s26
      %s29 = sshll.u32 [#allocation5], 4
      %s30 = int_to_ptr.vmem [resolvable:$true] %s29
      %32 = dma.hbm_to_vmem [thread:$0]  %s1, 16, %s30, [#allocation6]
    $region9: #{tpu_custom_call.1} parent=1 // pred_fallthru
      _
    // Predicated region
    $region10: #{tpu_custom_call.1} parent=1 // pred_check
      _
    $region11: #{tpu_custom_call.1} parent=1 // pred_check_branch
      %34 = sbr.rel (0) target = $region13
    $region12: #{tpu_custom_call.1} parent=1 // pred_region
      %s36 = ssub.s32 16, 16
      %37 = vsyncadd [#allocation6], %s36
      %s39 = sshll.u32 [#allocation7], 4
      %s40 = int_to_ptr.vmem [resolvable:$true] %s39
      %42 = dma.hbm_to_vmem [thread:$0]  %s2, 16, %s40, [#allocation6]
    $region13: #{tpu_custom_call.1} parent=1 // pred_fallthru
      _
    // Predicated region
    $region14: #{tpu_custom_call.1} parent=1 // pred_check
      _
    $region15: #{tpu_custom_call.1} parent=1 // pred_check_branch
      %44 = sbr.rel (0) target = $region17
    $region16: #{tpu_custom_call.1} parent=1 // pred_region
      %45 = dma.done [#allocation3], 256
    $region17: #{tpu_custom_call.1} parent=1 // pred_fallthru
      _
    // Predicated region
    $region18: #{tpu_custom_call.1} parent=1 // pred_check
      _
    $region19: #{tpu_custom_call.1} parent=1 // pred_check_branch
      %47 = sbr.rel (0) target = $region21
    $region20: #{tpu_custom_call.1} parent=1 // pred_region
      %48 = dma.done [#allocation6], 16
    $region21: #{tpu_custom_call.1} parent=1 // pred_fallthru
      _
    // Predicated region
    $region22: #{tpu_custom_call.1} parent=1 // pred_check
      _
    $region23: #{tpu_custom_call.1} parent=1 // pred_check_branch
      %50 = sbr.rel (0) target = $region25
    $region24: #{tpu_custom_call.1} parent=1 // pred_region
      %51 = dma.done [#allocation6], 16
    $region25: #{tpu_custom_call.1} parent=1 // pred_fallthru
      _
    %v52 = vld [vmem:[#allocation2] sm:$0xff]
    %v53 = vld [vmem:[#allocation2 + $0x8] sm:$0xff]
    %vm54 = vcmask 261120
    %v55 = vsel %vm54, %v52, 0.0
    %56 = vadd.xlane.f32.xlu0 %v55
    %v57 = vpop.xlane.xlu0 %56
    %v58 = vsel %vm54, %v53, 0.0
    %59 = vadd.xlane.f32.xlu0 %v58
    %v60 = vpop.xlane.xlu0 %59
    %v61 = vmul.f32 %v52, %v52
    %v62 = vmul.f32 %v53, %v53
    %v63 = vsel %vm54, %v61, 0.0
    %64 = vadd.xlane.f32.xlu0 %v63
    %v65 = vpop.xlane.xlu0 %64
    %v66 = vsel %vm54, %v62, 0.0
    %67 = vadd.xlane.f32.xlu0 %v66
    %v68 = vpop.xlane.xlu0 %67
    %v69 = vmul.f32 %v57, 0.03125
    %v70 = vmul.f32 %v60, 0.03125
    %v71 = vmul.f32 %v65, 0.03125
    %v72 = vmul.f32 %v68, 0.03125
    %v73 = vmul.f32 %v69, %v69
    %v74 = vmul.f32 %v70, %v70
    %v75 = vsub.f32 %v71, %v73
    %v76 = vsub.f32 %v72, %v74
    %v77 = vmax.f32 %v75, 0.0
    %v78 = vmax.f32 %v76, 0.0
    %v79 = vadd.f32 %v77, 1e-12
    %v80 = vadd.f32 %v78, 1e-12
    %v81 = vrsqrt.pop %v79
    %v82 = vrsqrt.pop %v80
    %v83 = vsub.f32 %v52, %v69
    %v84 = vsub.f32 %v53, %v70
    %v85 = vmul.f32 %v83, %v81
    %v86 = vmul.f32 %v84, %v82
    %v87 = vld [vmem:[#allocation5] sm:$0x1]
    %v89 = vlaneseq
    %v90 = vshrl.u32 %v89, 7
    %v91 = vsub.s32 0, %v90
    %v92 = vrot.slane %v87, %v91
    %v94 = vmul.f32 %v92, %v85
    %v95 = vmul.f32 %v92, %v86
    %v96 = vld [vmem:[#allocation7] sm:$0x1]
    %v98 = vlaneseq
    %v99 = vshrl.u32 %v98, 7
    %v100 = vsub.s32 0, %v99
    %v101 = vrot.slane %v96, %v100
    %v103 = vadd.f32 %v94, %v101
    %v104 = vadd.f32 %v95, %v101
    %105 = vst.msk [vmem:[#allocation8] sm:$0xff] %vm54, %v103
    %106 = vst.msk [vmem:[#allocation8 + $0x8] sm:$0xff] %vm54, %v104
    // Predicated region
    $region26: #{tpu_custom_call.1} parent=1 // pred_check
      _
    $region27: #{tpu_custom_call.1} parent=1 // pred_check_branch
      %108 = sbr.rel (0) target = $region29
    $region28: #{tpu_custom_call.1} parent=1 // pred_region
      %s110 = ssub.s32 256, 256
      %111 = vsyncadd [#allocation4], %s110
      %s112 = sshll.u32 [#allocation8], 4
      %s113 = int_to_ptr.vmem [resolvable:$true] %s112
      %118 = dma.vmem_to_hbm [thread:$0]  %s113, 256, %s3, [#allocation4], 128, 128, 8
    $region29: #{tpu_custom_call.1} parent=1 // pred_fallthru
      _
    // Predicated region
    $region30: #{tpu_custom_call.1} parent=1 // pred_check
      _
    $region31: #{tpu_custom_call.1} parent=1 // pred_check_branch
      %120 = sbr.rel (0) target = $region33
    $region32: #{tpu_custom_call.1} parent=1 // pred_region
      %121 = dma.done [#allocation4], 256
    $region33: #{tpu_custom_call.1} parent=1 // pred_fallthru
      _
    %122 = vsyncpa [#allocation3], 1
    %123 = vsyncpa [#allocation6], 1
    %124 = vsyncpa [#allocation4], 1

</llo_original>
